<compile_context>
chip_gen: v6e
topology: v6e:2x2x1
jax: 0.10.0
libtpu: 0.0.40
codegen_flags: <defaults>
</compile_context>

<pallas_src>
import jax
import jax.numpy as jnp
from jax.experimental import pallas as pl
from jax.experimental.pallas import tpu as pltpu

LANE = 128
SUBLANE = 16  # bf16 sublane packing; also satisfies the generic 8-row rule


def _round_up(n, m):
    return ((n + m - 1) // m) * m


# ---------------------------------------------------------------------------
# Kernel: fused 4-layer MLP. Weights are pre-transposed ([in, out]) bf16; the
# hidden 64-dims / num_classes are zero-padded to 128 lanes. f32 accumulation.
# ---------------------------------------------------------------------------
def _mlp_kernel(x_ref,
                w1_ref, b1_ref,
                w2_ref, b2_ref,
                w3_ref, b3_ref,
                w4_ref, b4_ref,
                o_ref):
    # Fused cast: x arrives as f32 straight from HBM; bf16 is the MXU-native dtype.
    x = x_ref[...].astype(jnp.bfloat16)

    # Layer 1: Linear(input_dim, 256) + ReLU   (Dropout(0.3) identity at eval)
    h = jnp.dot(x, w1_ref[...], preferred_element_type=jnp.float32) + b1_ref[...]
    h = jnp.maximum(h, 0.0).astype(jnp.bfloat16)

    # Layer 2: Linear(256, 128) + ReLU         (Dropout(0.2) identity at eval)
    h = jnp.dot(h, w2_ref[...], preferred_element_type=jnp.float32) + b2_ref[...]
    h = jnp.maximum(h, 0.0).astype(jnp.bfloat16)

    # Layer 3: Linear(128, 64) + ReLU   (out dim zero-padded 64 -> 128)
    h = jnp.dot(h, w3_ref[...], preferred_element_type=jnp.float32) + b3_ref[...]
    h = jnp.maximum(h, 0.0).astype(jnp.bfloat16)

    # Layer 4: Linear(64, num_classes)  (logits zero-padded to 128 lanes)
    out = jnp.dot(h, w4_ref[...], preferred_element_type=jnp.float32) + b4_ref[...]
    o_ref[...] = out.astype(o_ref.dtype)


def _choose_batch_tile(B, max_tile):
    """Pick (tile, num_tiles): balanced tiles, even tile count for v7x megacore."""
    max_tile = max(SUBLANE, (max_tile // SUBLANE) * SUBLANE)
    tb = min(max_tile, _round_up(B, SUBLANE))
    n = pl.cdiv(B, tb)
    if n > 1:
        if n % 2:
            n += 1  # even #steps -> both v7x TensorCores get equal work
        tb = _round_up(pl.cdiv(B, n), SUBLANE)   # spread the tail evenly
        n = pl.cdiv(B, tb)
    return tb, n


def mediapipe_classifier_forward(x, params, num_classes, *, batch_tile=2048):
    """Run the fused MLP Pallas kernel.

    x:      [B, input_dim] float32 (consumed directly; cast/pad fused in-kernel)
    params: dict from init_params() — bf16 weights w1..w4 ([in, out], out dims
            lane-padded to 128), f32 biases b1..b4 ([1, out_padded]).
    returns [B, num_classes] bfloat16 logits
    """
    B, d_in = x.shape
    assert params["w1"].shape[0] == d_in, "input_dim mismatch with params"
    d_out_p = params["w4"].shape[1]        # 128 (num_classes lane-padded)

    tb, n_tiles = _choose_batch_tile(B, batch_tile)
    grid = (n_tiles,)

    def _resident(shape):
        # Constant block index -> weights/biases stay resident in VMEM.
        return pl.BlockSpec(shape, lambda i: (0, 0))

    in_specs = [
        pl.BlockSpec((tb, d_in), lambda i: (i, 0)),   # last dim == full array dim
        _resident(params["w1"].shape), _resident(params["b1"].shape),
        _resident(params["w2"].shape), _resident(params["b2"].shape),
        _resident(params["w3"].shape), _resident(params["b3"].shape),
        _resident(params["w4"].shape), _resident(params["b4"].shape),
    ]
    out_specs = pl.BlockSpec((tb, d_out_p), lambda i: (i, 0))

    flops = 2 * B * (d_in * 256 + 256 * 128 + 128 * 128 + 128 * d_out_p)
    bytes_accessed = (
        int(x.size) * x.dtype.itemsize                 # f32 input
        + B * d_out_p * 2                              # bf16 output
        + sum(int(v.size) * v.dtype.itemsize for v in params.values())
    )

    out = pl.pallas_call(
        _mlp_kernel,
        out_shape=jax.ShapeDtypeStruct((B, d_out_p), jnp.bfloat16),
        grid=grid,
        in_specs=in_specs,
        out_specs=out_specs,
        compiler_params=pltpu.CompilerParams(
            dimension_semantics=("parallel",),         # shard batch across TCs (v7x)
            vmem_limit_bytes=32 * 1024 * 1024,         # fits v7x 64 MiB w/ headroom
        ),
        cost_estimate=pl.CostEstimate(
            flops=flops, transcendentals=0, bytes_accessed=bytes_accessed),
    )(x,
      params["w1"], params["b1"],
      params["w2"], params["b2"],
      params["w3"], params["b3"],
      params["w4"], params["b4"])

    # Lane slice only (batch dim already exact). Downstream that can consume the
    # padded [B, 128] block may skip this slice entirely.
    return out[:, :num_classes]


def init_params(key, input_dim=84, num_classes=10):
    """Deterministic synthetic init (PyTorch-like uniform fan-in scaling).

    Weights stored transposed ([in, out]) in bf16. Layer-output dims (and the
    inner 64-dim) are zero-padded to 128 lanes; layer-1 K stays = input_dim.
    Zero padding keeps the numerics identical to the unpadded model.
    """
    dims = [input_dim, 256, 128, 64, num_classes]
    pad_in = [input_dim, 256, 128, 128]    # padded contraction dims per layer
    pad_out = [256, 128, 128, _round_up(num_classes, LANE)]  # padded out dims
    params = {}
    for i in range(4):
        fan_in, fan_out = dims[i], dims[i + 1]
        pin, pout = pad_in[i], pad_out[i]
        key, kw, kb = jax.random.split(key, 3)
        bound = float(fan_in) ** -0.5
        w = jax.random.uniform(kw, (fan_in, fan_out), jnp.float32, -bound, bound)
        b = jax.random.uniform(kb, (1, fan_out), jnp.float32, -bound, bound)
        w_p = jnp.zeros((pin, pout), jnp.float32).at[:fan_in, :fan_out].set(w)
        b_p = jnp.zeros((1, pout), jnp.float32).at[:, :fan_out].set(b)
        params[f"w{i + 1}"] = w_p.astype(jnp.bfloat16)
        params[f"b{i + 1}"] = b_p
    return params


def reference_forward(x, params, num_classes):
    """Pure-JAX reference mirroring the kernel's bf16 / f32-accumulate math."""
    def q(a):
        return a.astype(jnp.bfloat16).astype(jnp.float32)

    h = q(x)
    h = jnp.maximum(h @ params["w1"].astype(jnp.float32) + params["b1"], 0.0)
    h = q(h)
    h = jnp.maximum(h @ params["w2"].astype(jnp.float32) + params["b2"], 0.0)
    h = q(h)
    h = jnp.maximum(h @ params["w3"].astype(jnp.float32) + params["b3"], 0.0)
    h = q(h)
    out = h @ params["w4"].astype(jnp.float32) + params["b4"]
    return out[:, :num_classes]


if __name__ == "__main__":
    key = jax.random.PRNGKey(0)
    input_dim, num_classes = 84, 10
    params = init_params(key, input_dim=input_dim, num_classes=num_classes)

    def _check(batch, tag):
        kx = jax.random.fold_in(jax.random.PRNGKey(1), batch)
        x = jax.random.normal(kx, (batch, input_dim), jnp.float32)
        out = jax.block_until_ready(
            mediapipe_classifier_forward(x, params, num_classes))
        ref = reference_forward(x, params, num_classes)
        assert out.shape == (batch, num_classes), (tag, out.shape)
        assert jnp.allclose(out.astype(jnp.float32), ref, atol=2e-2, rtol=2e-2), \
            f"{tag}: mismatch vs reference"

    # Latency path: B < one sublane tile -> single partial block.
    _check(8, "small-batch")
    # Single full tile, exact batch.
    _check(640, "single-tile")
    # Throughput path: two balanced tiles + masked partial tail.
    _check(2500, "multi-tile")

    print("KERNEL_OK")
</pallas_src>

<mosaic_0001>
module attributes {stable_mosaic.version = 11 : i64} {
  func.func @_mlp_kernel(%arg0: i32, %arg1: memref<16x84xf32, #tpu.memory_space<vmem>>, %arg2: memref<84x256xbf16, #tpu.memory_space<vmem>>, %arg3: memref<1x256xf32, #tpu.memory_space<vmem>>, %arg4: memref<256x128xbf16, #tpu.memory_space<vmem>>, %arg5: memref<1x128xf32, #tpu.memory_space<vmem>>, %arg6: memref<128x128xbf16, #tpu.memory_space<vmem>>, %arg7: memref<1x128xf32, #tpu.memory_space<vmem>>, %arg8: memref<128x128xbf16, #tpu.memory_space<vmem>>, %arg9: memref<1x128xf32, #tpu.memory_space<vmem>>, %arg10: memref<16x128xbf16, #tpu.memory_space<vmem>>) attributes {dimension_semantics = [#tpu.dimension_semantics<parallel>], iteration_bounds = array<i64: 1>, scalar_prefetch = 0 : i64, scratch_operands = 0 : i64, tpu.core_type = #tpu.core_type<tc>, window_params = [{transform_indices = @transform_0, window_bounds = array<i64: 16, 84>}, {pipeline_mode = #tpu.pipeline_mode<synchronous>, transform_indices = @transform_1, window_bounds = array<i64: 84, 256>}, {pipeline_mode = #tpu.pipeline_mode<synchronous>, transform_indices = @transform_2, window_bounds = array<i64: 1, 256>}, {pipeline_mode = #tpu.pipeline_mode<synchronous>, transform_indices = @transform_3, window_bounds = array<i64: 256, 128>}, {pipeline_mode = #tpu.pipeline_mode<synchronous>, transform_indices = @transform_4, window_bounds = array<i64: 1, 128>}, {pipeline_mode = #tpu.pipeline_mode<synchronous>, transform_indices = @transform_5, window_bounds = array<i64: 128, 128>}, {pipeline_mode = #tpu.pipeline_mode<synchronous>, transform_indices = @transform_6, window_bounds = array<i64: 1, 128>}, {pipeline_mode = #tpu.pipeline_mode<synchronous>, transform_indices = @transform_7, window_bounds = array<i64: 128, 128>}, {pipeline_mode = #tpu.pipeline_mode<synchronous>, transform_indices = @transform_8, window_bounds = array<i64: 1, 128>}, {transform_indices = @transform_9, window_bounds = array<i64: 16, 128>}]} {
    %c0 = arith.constant 0 : index
    %c0_0 = arith.constant 0 : index
    %0 = vector.load %arg1[%c0, %c0_0] : memref<16x84xf32, #tpu.memory_space<vmem>>, vector<16x84xf32>
    %1 = arith.truncf %0 : vector<16x84xf32> to vector<16x84xbf16>
    %c0_1 = arith.constant 0 : index
    %c0_2 = arith.constant 0 : index
    %2 = vector.load %arg2[%c0_1, %c0_2] : memref<84x256xbf16, #tpu.memory_space<vmem>>, vector<84x256xbf16>
    %cst = arith.constant dense<0.000000e+00> : vector<16x256xf32>
    %3 = tpu.matmul %1, %2, %cst {dimension_numbers = #tpu.dot_dimension_numbers<[1], [0], [0], [1], [0, 0, 1, 1], [], []>} : vector<16x84xbf16>, vector<84x256xbf16>, vector<16x256xf32> -> vector<16x256xf32>
    %c0_3 = arith.constant 0 : index
    %c0_4 = arith.constant 0 : index
    %4 = vector.load %arg3[%c0_3, %c0_4] : memref<1x256xf32, #tpu.memory_space<vmem>>, vector<1x256xf32>
    %5 = vector.broadcast %4 : vector<1x256xf32> to vector<16x256xf32>
    %6 = arith.addf %3, %5 : vector<16x256xf32>
    %cst_5 = arith.constant 0.000000e+00 : f32
    %7 = vector.broadcast %cst_5 : f32 to vector<16x256xf32>
    %8 = arith.maximumf %6, %7 : vector<16x256xf32>
    %9 = arith.truncf %8 : vector<16x256xf32> to vector<16x256xbf16>
    %c0_6 = arith.constant 0 : index
    %c0_7 = arith.constant 0 : index
    %10 = vector.load %arg4[%c0_6, %c0_7] : memref<256x128xbf16, #tpu.memory_space<vmem>>, vector<256x128xbf16>
    %cst_8 = arith.constant dense<0.000000e+00> : vector<16x128xf32>
    %11 = tpu.matmul %9, %10, %cst_8 {dimension_numbers = #tpu.dot_dimension_numbers<[1], [0], [0], [1], [0, 0, 1, 1], [], []>} : vector<16x256xbf16>, vector<256x128xbf16>, vector<16x128xf32> -> vector<16x128xf32>
    %c0_9 = arith.constant 0 : index
    %c0_10 = arith.constant 0 : index
    %12 = vector.load %arg5[%c0_9, %c0_10] : memref<1x128xf32, #tpu.memory_space<vmem>>, vector<1x128xf32>
    %13 = vector.broadcast %12 : vector<1x128xf32> to vector<16x128xf32>
    %14 = arith.addf %11, %13 : vector<16x128xf32>
    %cst_11 = arith.constant 0.000000e+00 : f32
    %15 = vector.broadcast %cst_11 : f32 to vector<16x128xf32>
    %16 = arith.maximumf %14, %15 : vector<16x128xf32>
    %17 = arith.truncf %16 : vector<16x128xf32> to vector<16x128xbf16>
    %c0_12 = arith.constant 0 : index
    %c0_13 = arith.constant 0 : index
    %18 = vector.load %arg6[%c0_12, %c0_13] : memref<128x128xbf16, #tpu.memory_space<vmem>>, vector<128x128xbf16>
    %cst_14 = arith.constant dense<0.000000e+00> : vector<16x128xf32>
    %19 = tpu.matmul %17, %18, %cst_14 {dimension_numbers = #tpu.dot_dimension_numbers<[1], [0], [0], [1], [0, 0, 1, 1], [], []>} : vector<16x128xbf16>, vector<128x128xbf16>, vector<16x128xf32> -> vector<16x128xf32>
    %c0_15 = arith.constant 0 : index
    %c0_16 = arith.constant 0 : index
    %20 = vector.load %arg7[%c0_15, %c0_16] : memref<1x128xf32, #tpu.memory_space<vmem>>, vector<1x128xf32>
    %21 = vector.broadcast %20 : vector<1x128xf32> to vector<16x128xf32>
    %22 = arith.addf %19, %21 : vector<16x128xf32>
    %cst_17 = arith.constant 0.000000e+00 : f32
    %23 = vector.broadcast %cst_17 : f32 to vector<16x128xf32>
    %24 = arith.maximumf %22, %23 : vector<16x128xf32>
    %25 = arith.truncf %24 : vector<16x128xf32> to vector<16x128xbf16>
    %c0_18 = arith.constant 0 : index
    %c0_19 = arith.constant 0 : index
    %26 = vector.load %arg8[%c0_18, %c0_19] : memref<128x128xbf16, #tpu.memory_space<vmem>>, vector<128x128xbf16>
    %cst_20 = arith.constant dense<0.000000e+00> : vector<16x128xf32>
    %27 = tpu.matmul %25, %26, %cst_20 {dimension_numbers = #tpu.dot_dimension_numbers<[1], [0], [0], [1], [0, 0, 1, 1], [], []>} : vector<16x128xbf16>, vector<128x128xbf16>, vector<16x128xf32> -> vector<16x128xf32>
    %c0_21 = arith.constant 0 : index
    %c0_22 = arith.constant 0 : index
    %28 = vector.load %arg9[%c0_21, %c0_22] : memref<1x128xf32, #tpu.memory_space<vmem>>, vector<1x128xf32>
    %29 = vector.broadcast %28 : vector<1x128xf32> to vector<16x128xf32>
    %30 = arith.addf %27, %29 : vector<16x128xf32>
    %31 = arith.truncf %30 : vector<16x128xf32> to vector<16x128xbf16>
    %c0_23 = arith.constant 0 : index
    %c0_24 = arith.constant 0 : index
    %32 = vector.load %arg10[%c0_23, %c0_24] : memref<16x128xbf16, #tpu.memory_space<vmem>>, vector<16x128xbf16>
    tpu.vector_store %arg10[%c0_23, %c0_24], %31 {strides = array<i32>} : memref<16x128xbf16, #tpu.memory_space<vmem>>, vector<16x128xbf16>,
    return
  }
  func.func @transform_0(%arg0: i32) -> (i32, i32) {
    %c0_i32 = arith.constant 0 : i32
    %c0_i32_0 = arith.constant 0 : i32
    return %arg0, %c0_i32 : i32, i32
  }
  func.func @transform_1(%arg0: i32) -> (i32, i32) {
    %c0_i32 = arith.constant 0 : i32
    %c0_i32_0 = arith.constant 0 : i32
    %c0_i32_1 = arith.constant 0 : i32
    return %c0_i32, %c0_i32_0 : i32, i32
  }
  func.func @transform_2(%arg0: i32) -> (i32, i32) {
    %c0_i32 = arith.constant 0 : i32
    %c0_i32_0 = arith.constant 0 : i32
    %c0_i32_1 = arith.constant 0 : i32
    return %c0_i32, %c0_i32_0 : i32, i32
  }
  func.func @transform_3(%arg0: i32) -> (i32, i32) {
    %c0_i32 = arith.constant 0 : i32
    %c0_i32_0 = arith.constant 0 : i32
    %c0_i32_1 = arith.constant 0 : i32
    return %c0_i32, %c0_i32_0 : i32, i32
  }
  func.func @transform_4(%arg0: i32) -> (i32, i32) {
    %c0_i32 = arith.constant 0 : i32
    %c0_i32_0 = arith.constant 0 : i32
    %c0_i32_1 = arith.constant 0 : i32
    return %c0_i32, %c0_i32_0 : i32, i32
  }
  func.func @transform_5(%arg0: i32) -> (i32, i32) {
    %c0_i32 = arith.constant 0 : i32
    %c0_i32_0 = arith.constant 0 : i32
    %c0_i32_1 = arith.constant 0 : i32
    return %c0_i32, %c0_i32_0 : i32, i32
  }
  func.func @transform_6(%arg0: i32) -> (i32, i32) {
    %c0_i32 = arith.constant 0 : i32
    %c0_i32_0 = arith.constant 0 : i32
    %c0_i32_1 = arith.constant 0 : i32
    return %c0_i32, %c0_i32_0 : i32, i32
  }
  func.func @transform_7(%arg0: i32) -> (i32, i32) {
    %c0_i32 = arith.constant 0 : i32
    %c0_i32_0 = arith.constant 0 : i32
    %c0_i32_1 = arith.constant 0 : i32
    return %c0_i32, %c0_i32_0 : i32, i32
  }
  func.func @transform_8(%arg0: i32) -> (i32, i32) {
    %c0_i32 = arith.constant 0 : i32
    %c0_i32_0 = arith.constant 0 : i32
    %c0_i32_1 = arith.constant 0 : i32
    return %c0_i32, %c0_i32_0 : i32, i32
  }
  func.func @transform_9(%arg0: i32) -> (i32, i32) {
    %c0_i32 = arith.constant 0 : i32
    %c0_i32_0 = arith.constant 0 : i32
    return %arg0, %c0_i32 : i32, i32
  }
}

</mosaic_0001>

<llo_original>
// kernel: tpu_custom_call.1
$region0: #{tpu_custom_call.1}
  #allocation0 [shape = 'u32[]', space=smem, size = 0x4, offset = 0x4, fixed_abs, tag = 'smem constant byte address 0x4 - core index']
  #allocation1 [shape = 'u32[144,128]{1,0:T(1,128)}', space=vmem, size = 0x12000, scoped, tag = 'internal scratch']
  %s0 = inlined_call_operand.hbm [shape: f32[8,84], index: 0, kind: input, shape index: {}]
  %s1 = inlined_call_operand.hbm [shape: bf16[84,256], index: 1, kind: input, shape index: {}]
  %s2 = inlined_call_operand.vmem [shape: f32[1,256], index: 2, kind: input, shape index: {}]
  %s3 = inlined_call_operand.hbm [shape: bf16[256,128], index: 3, kind: input, shape index: {}]
  %s4 = inlined_call_operand.vmem [shape: f32[1,128], index: 4, kind: input, shape index: {}]
  %s5 = inlined_call_operand.hbm [shape: bf16[128,128], index: 5, kind: input, shape index: {}]
  %s6 = inlined_call_operand.vmem [shape: f32[1,128], index: 6, kind: input, shape index: {}]
  %s7 = inlined_call_operand.hbm [shape: bf16[128,128], index: 7, kind: input, shape index: {}]
  %s8 = inlined_call_operand.vmem [shape: f32[1,128], index: 8, kind: input, shape index: {}]
  %s9 = inlined_call_operand.hbm [shape: bf16[8,128], index: 9, kind: output, shape index: {}]
  %s10 = sld [smem:[#allocation0]]
  $region66: #{tpu_custom_call.1} parent=0
    _
  %s12 = ssub.s32 1, %s10
  %s13 = scalar_select 0, %s12, %s10
  $region1: #{tpu_custom_call.1} parent=0
    #allocation2 [shape = 'u8[8192]{0}', space=vmem, size = 0x2000, scoped, tag = 'input window, operand 0, single buffered']
    #allocation3 [shape = 's32[1]{0}', space=sflag, size = 0x4, scoped, tag = 'scoped memory for tpu_custom_call.1']
    #allocation4 [shape = 's32[1]{0}', space=sflag, size = 0x4, scoped, tag = 'scoped memory for tpu_custom_call.1']
    #allocation5 [shape = 'u8[45056]{0}', space=vmem, size = 0xb000, scoped, tag = 'input window, operand 1, single buffered']
    #allocation6 [shape = 's32[1]{0}', space=sflag, size = 0x4, scoped, tag = 'scoped memory for tpu_custom_call.1']
    #allocation7 [shape = 'u8[65536]{0}', space=vmem, size = 0x10000, scoped, tag = 'input window, operand 3, single buffered']
    #allocation8 [shape = 'u8[32768]{0}', space=vmem, size = 0x8000, scoped, tag = 'input window, operand 5, single buffered']
    #allocation9 [shape = 's32[1]{0}', space=sflag, size = 0x4, scoped, tag = 'scoped memory for tpu_custom_call.1']
    #allocation10 [shape = 'u8[32768]{0}', space=vmem, size = 0x8000, scoped, tag = 'input window, operand 7, single buffered']
    #allocation11 [shape = 'u8[4096]{0}', space=vmem, size = 0x1000, scoped, tag = 'output window, operand 0, single buffered']
    %14 = vsyncpa [#allocation3], 0
    %15 = vsyncpa [#allocation6], 0
    %16 = vsyncpa [#allocation9], 0
    %17 = vsyncpa [#allocation4], 0
    // Predicated region
    $region2: #{tpu_custom_call.1} parent=1 // pred_check
      _
    $region3: #{tpu_custom_call.1} parent=1 // pred_check_branch
      %19 = sbr.rel (0) target = $region5
    $region4: #{tpu_custom_call.1} parent=1 // pred_region
      %s21 = ssub.s32 256, 128
      %22 = vsyncadd [#allocation3], %s21
      %s23 = sshll.u32 [#allocation2], 4
      %s24 = int_to_ptr.vmem [resolvable:$true] %s23
      %29 = dma.hbm_to_vmem [thread:$0]  %s0, 128, %s24, [#allocation3], 128, 128, 8
    $region5: #{tpu_custom_call.1} parent=1 // pred_fallthru
      _
    // Predicated region
    $region6: #{tpu_custom_call.1} parent=1 // pred_check
      _
    $region7: #{tpu_custom_call.1} parent=1 // pred_check_branch
      %31 = sbr.rel (0) target = $region9
    $region8: #{tpu_custom_call.1} parent=1 // pred_region
      %s33 = ssub.s32 1408, 1408
      %34 = vsyncadd [#allocation6], %s33
      %s35 = sshll.u32 [#allocation5], 4
      %s36 = int_to_ptr.vmem [resolvable:$true] %s35
      %41 = dma.hbm_to_vmem [thread:$0]  %s1, 1408, %s36, [#allocation6], 128, 128, 8
    $region9: #{tpu_custom_call.1} parent=1 // pred_fallthru
      _
    // Predicated region
    $region10: #{tpu_custom_call.1} parent=1 // pred_check
      _
    $region11: #{tpu_custom_call.1} parent=1 // pred_check_branch
      %43 = sbr.rel (0) target = $region13
    $region12: #{tpu_custom_call.1} parent=1 // pred_region
      _
    $region13: #{tpu_custom_call.1} parent=1 // pred_fallthru
      _
    // Predicated region
    $region14: #{tpu_custom_call.1} parent=1 // pred_check
      _
    $region15: #{tpu_custom_call.1} parent=1 // pred_check_branch
      %45 = sbr.rel (0) target = $region17
    $region16: #{tpu_custom_call.1} parent=1 // pred_region
      %s47 = ssub.s32 2048, 2048
      %48 = vsyncadd [#allocation6], %s47
      %s49 = sshll.u32 [#allocation7], 4
      %s50 = int_to_ptr.vmem [resolvable:$true] %s49
      %55 = dma.hbm_to_vmem [thread:$0]  %s3, 2048, %s50, [#allocation6], 64, 64, 4
    $region17: #{tpu_custom_call.1} parent=1 // pred_fallthru
      _
    // Predicated region
    $region18: #{tpu_custom_call.1} parent=1 // pred_check
      _
    $region19: #{tpu_custom_call.1} parent=1 // pred_check_branch
      %57 = sbr.rel (0) target = $region21
    $region20: #{tpu_custom_call.1} parent=1 // pred_region
      _
    $region21: #{tpu_custom_call.1} parent=1 // pred_fallthru
      _
    // Predicated region
    $region22: #{tpu_custom_call.1} parent=1 // pred_check
      _
    $region23: #{tpu_custom_call.1} parent=1 // pred_check_branch
      %59 = sbr.rel (0) target = $region25
    $region24: #{tpu_custom_call.1} parent=1 // pred_region
      %s61 = ssub.s32 1024, 1024
      %62 = vsyncadd [#allocation9], %s61
      %s63 = sshll.u32 [#allocation8], 4
      %s64 = int_to_ptr.vmem [resolvable:$true] %s63
      %69 = dma.hbm_to_vmem [thread:$0]  %s5, 1024, %s64, [#allocation9], 64, 64, 4
    $region25: #{tpu_custom_call.1} parent=1 // pred_fallthru
      _
    // Predicated region
    $region26: #{tpu_custom_call.1} parent=1 // pred_check
      _
    $region27: #{tpu_custom_call.1} parent=1 // pred_check_branch
      %71 = sbr.rel (0) target = $region29
    $region28: #{tpu_custom_call.1} parent=1 // pred_region
      _
    $region29: #{tpu_custom_call.1} parent=1 // pred_fallthru
      _
    // Predicated region
    $region30: #{tpu_custom_call.1} parent=1 // pred_check
      _
    $region31: #{tpu_custom_call.1} parent=1 // pred_check_branch
      %73 = sbr.rel (0) target = $region33
    $region32: #{tpu_custom_call.1} parent=1 // pred_region
      %s75 = ssub.s32 1024, 1024
      %76 = vsyncadd [#allocation9], %s75
      %s77 = sshll.u32 [#allocation10], 4
      %s78 = int_to_ptr.vmem [resolvable:$true] %s77
      %83 = dma.hbm_to_vmem [thread:$0]  %s7, 1024, %s78, [#allocation9], 64, 64, 4
    $region33: #{tpu_custom_call.1} parent=1 // pred_fallthru
      _
    // Predicated region
    $region34: #{tpu_custom_call.1} parent=1 // pred_check
      _
    $region35: #{tpu_custom_call.1} parent=1 // pred_check_branch
      %85 = sbr.rel (0) target = $region37
    $region36: #{tpu_custom_call.1} parent=1 // pred_region
      _
    $region37: #{tpu_custom_call.1} parent=1 // pred_fallthru
      _
    // Predicated region
    $region38: #{tpu_custom_call.1} parent=1 // pred_check
      _
    $region39: #{tpu_custom_call.1} parent=1 // pred_check_branch
      %87 = sbr.rel (0) target = $region41
    $region40: #{tpu_custom_call.1} parent=1 // pred_region
      %88 = dma.done [#allocation3], 256
    $region41: #{tpu_custom_call.1} parent=1 // pred_fallthru
      _
    // Predicated region
    $region42: #{tpu_custom_call.1} parent=1 // pred_check
      _
    $region43: #{tpu_custom_call.1} parent=1 // pred_check_branch
      %90 = sbr.rel (0) target = $region45
    $region44: #{tpu_custom_call.1} parent=1 // pred_region
      %91 = dma.done [#allocation6], 1408
    $region45: #{tpu_custom_call.1} parent=1 // pred_fallthru
      _
    // Predicated region
    $region46: #{tpu_custom_call.1} parent=1 // pred_check
      _
    $region47: #{tpu_custom_call.1} parent=1 // pred_check_branch
      %93 = sbr.rel (0) target = $region49
    $region48: #{tpu_custom_call.1} parent=1 // pred_region
      %94 = dma.done [#allocation6], 2048
    $region49: #{tpu_custom_call.1} parent=1 // pred_fallthru
      _
    // Predicated region
    $region50: #{tpu_custom_call.1} parent=1 // pred_check
      _
    $region51: #{tpu_custom_call.1} parent=1 // pred_check_branch
      %96 = sbr.rel (0) target = $region53
    $region52: #{tpu_custom_call.1} parent=1 // pred_region
      %97 = dma.done [#allocation9], 1024
    $region53: #{tpu_custom_call.1} parent=1 // pred_fallthru
      _
    // Predicated region
    $region54: #{tpu_custom_call.1} parent=1 // pred_check
      _
    $region55: #{tpu_custom_call.1} parent=1 // pred_check_branch
      %99 = sbr.rel (0) target = $region57
    $region56: #{tpu_custom_call.1} parent=1 // pred_region
      %100 = dma.done [#allocation9], 1024
    $region57: #{tpu_custom_call.1} parent=1 // pred_fallthru
      _
    %v102 = vld [vmem:[#allocation2] sm:$0xff]
    %v103 = vld [vmem:[#allocation2 + $0x8] sm:$0xff]
    %v104 = vpack.c.bf16 %v103, %v102
    %v105 = vld [vmem:[#allocation5] sm:$0xff]
    %v106 = vld [vmem:[#allocation5 + $0x8] sm:$0xff]
    %v107 = vld [vmem:[#allocation5 + $0x10] sm:$0xff]
    %v108 = vld [vmem:[#allocation5 + $0x18] sm:$0xff]
    %v109 = vld [vmem:[#allocation5 + $0x20] sm:$0xff]
    %v110 = vld [vmem:[#allocation5 + $0x28] sm:$0xff]
    %v111 = vld [vmem:[#allocation5 + $0x30] sm:$0xff]
    %v112 = vld [vmem:[#allocation5 + $0x38] sm:$0xff]
    %v113 = vld [vmem:[#allocation5 + $0x40] sm:$0xff]
    %v114 = vld [vmem:[#allocation5 + $0x48] sm:$0xff]
    %v115 = vld [vmem:[#allocation5 + $0x50] sm:$0x33]
    %v116 = vld [vmem:[%s2] sm:$0x3]
    %v118 = vlaneseq
    %v119 = vshrl.u32 %v118, 7
    %v120 = vsub.s32 0, %v119
    %v121 = vrot.slane %v116, %v120
    %v122 = vlaneseq
    %v123 = vshrl.u32 %v122, 7
    %v124 = vsub.s32 1, %v123
    %v125 = vrot.slane %v116, %v124
    %v139 = vunpack.c.l.b16 %v105
    %v140 = vunpack.c.h.b16 %v105
    %v141 = vunpack.c.l.b16 %v106
    %v142 = vunpack.c.h.b16 %v106
    %v143 = vunpack.c.l.b16 %v107
    %v144 = vunpack.c.h.b16 %v107
    %v145 = vunpack.c.l.b16 %v108
    %v146 = vunpack.c.h.b16 %v108
    %v147 = vunpack.c.l.b16 %v109
    %v148 = vunpack.c.h.b16 %v109
    %v149 = vunpack.c.l.b16 %v110
    %v150 = vunpack.c.h.b16 %v110
    %v151 = vunpack.c.l.b16 %v111
    %v152 = vunpack.c.h.b16 %v111
    %v153 = vunpack.c.l.b16 %v112
    %v154 = vunpack.c.h.b16 %v112
    %v155 = vunpack.c.l.b16 %v113
    %v156 = vunpack.c.h.b16 %v113
    %v157 = vunpack.c.l.b16 %v114
    %v158 = vunpack.c.h.b16 %v114
    %v159 = vunpack.c.l.b16 %v115
    %v160 = vunpack.c.h.b16 %v115
    %v161 = vpack.c.b16 %v141, %v139
    %v162 = vpack.c.b16 %v142, %v140
    %v163 = vpack.c.b16 %v145, %v143
    %v164 = vpack.c.b16 %v146, %v144
    %v165 = vpack.c.b16 %v149, %v147
    %v166 = vpack.c.b16 %v150, %v148
    %v167 = vpack.c.b16 %v153, %v151
    %v168 = vpack.c.b16 %v154, %v152
    %v169 = vpack.c.b16 %v157, %v155
    %v170 = vpack.c.b16 %v158, %v156
    %v171 = vpack.c.b16 %v159, %v159
    %v172 = vpack.c.b16 %v160, %v160
    %vm183 = vcmask 687104
    %v185 = vsel %vm183, %v104, 0
    %vm187 = vcmask 1041408
    %v189 = vsel %vm187, %v171, 0
    %v192 = vsel %vm187, %v172, 0
    %194 = vmatprep.subr.bf16.mxu0 0
    %195 = vmatpush1.bf16.msra.mxu0 0
    %196 = vmatprep.subr.bf16.mxu0 0
    %197 = vmatpush1.bf16.msra.mxu0 0
    %198 = vmatprep.subr.bf16.mxu0 %v192
    %199 = vmatpush1.bf16.msra.mxu0 %v189
    %200 = vmatprep.subr.bf16.mxu0 %v170
    %201 = vmatpush1.bf16.msra.mxu0 %v169
    %202 = vmatprep.subr.bf16.mxu0 %v168
    %203 = vmatpush1.bf16.msra.mxu0 %v167
    %204 = vmatprep.subr.bf16.mxu0 %v166
    %205 = vmatpush1.bf16.msra.mxu0 %v165
    %206 = vmatprep.subr.bf16.mxu0 %v164
    %207 = vmatpush1.bf16.msra.mxu0 %v163
    %208 = vmatprep.subr.bf16.mxu0 %v162
    %209 = vmatpush1.bf16.msra.mxu0 %v161
    %210 = vmatprep.subr.bf16.mxu0 0
    %211 = vmatpush2.bf16.msra.mxu0 0
    %212 = vmatprep.subr.bf16.mxu0 0
    %213 = vmatpush2.bf16.msra.mxu0 0
    %214 = vmatprep.subr.bf16.mxu0 0
    %215 = vmatpush2.bf16.msra.mxu0 0
    %216 = vmatprep.subr.bf16.mxu0 0
    %217 = vmatpush2.bf16.msra.mxu0 0
    %218 = vmatprep.subr.bf16.mxu0 0
    %219 = vmatpush2.bf16.msra.mxu0 0
    %220 = vmatprep.subr.bf16.mxu0 0
    %221 = vmatpush2.bf16.msra.mxu0 0
    %222 = vmatprep.subr.bf16.mxu0 0
    %223 = vmatpush2.bf16.msra.mxu0 0
    %224 = vmatprep.subr.bf16.mxu0 0
    %225 = vmatpush2.bf16.msra.mxu0 0
    %226 = vmatprep.mubr.bf16.mxu0 0
    %227 = vmatmul.mubr.bf16.gmra.mxu0 %v185
    %v228 = vpop.f32.mrf.mxu0
    %v229 = vadd.f32 %v121, %v228
    %v230 = vpop.f32.mrf.mxu0
    %v231 = vadd.f32 %v125, %v230
    %v232 = vpop.f32.mrf.mxu0
    %v233 = vadd.f32 %v121, %v232
    %v234 = vpop.f32.mrf.mxu0
    %v235 = vadd.f32 %v125, %v234
    %236 = vdwg.mxu0
    %v237 = vmax.f32 %v229, 0.0
    %v238 = vmax.f32 %v231, 0.0
    %v239 = vmax.f32 %v233, 0.0
    %v240 = vmax.f32 %v235, 0.0
    %v241 = vpack.c.bf16 %v239, %v237
    %v242 = vpack.c.bf16 %v240, %v238
    %v243 = vld [vmem:[#allocation7] sm:$0xf]
    %v244 = vld [vmem:[#allocation7 + $0x4] sm:$0xf]
    %v245 = vld [vmem:[#allocation7 + $0x8] sm:$0xf]
    %v246 = vld [vmem:[#allocation7 + $0xc] sm:$0xf]
    %v247 = vld [vmem:[#allocation7 + $0x10] sm:$0xf]
    %v248 = vld [vmem:[#allocation7 + $0x14] sm:$0xf]
    %v249 = vld [vmem:[#allocation7 + $0x18] sm:$0xf]
    %v250 = vld [vmem:[#allocation7 + $0x1c] sm:$0xf]
    %v251 = vld [vmem:[#allocation7 + $0x20] sm:$0xf]
    %v252 = vld [vmem:[#allocation7 + $0x24] sm:$0xf]
    %v253 = vld [vmem:[#allocation7 + $0x28] sm:$0xf]
    %v254 = vld [vmem:[#allocation7 + $0x2c] sm:$0xf]
    %v255 = vld [vmem:[#allocation7 + $0x30] sm:$0xf]
    %v256 = vld [vmem:[#allocation7 + $0x34] sm:$0xf]
    %v257 = vld [vmem:[#allocation7 + $0x38] sm:$0xf]
    %v258 = vld [vmem:[#allocation7 + $0x3c] sm:$0xf]
    %v259 = vld [vmem:[#allocation7 + $0x40] sm:$0xf]
    %v260 = vld [vmem:[#allocation7 + $0x44] sm:$0xf]
    %v261 = vld [vmem:[#allocation7 + $0x48] sm:$0xf]
    %v262 = vld [vmem:[#allocation7 + $0x4c] sm:$0xf]
    %v263 = vld [vmem:[#allocation7 + $0x50] sm:$0xf]
    %v264 = vld [vmem:[#allocation7 + $0x54] sm:$0xf]
    %v265 = vld [vmem:[#allocation7 + $0x58] sm:$0xf]
    %v266 = vld [vmem:[#allocation7 + $0x5c] sm:$0xf]
    %v267 = vld [vmem:[#allocation7 + $0x60] sm:$0xf]
    %v268 = vld [vmem:[#allocation7 + $0x64] sm:$0xf]
    %v269 = vld [vmem:[#allocation7 + $0x68] sm:$0xf]
    %v270 = vld [vmem:[#allocation7 + $0x6c] sm:$0xf]
    %v271 = vld [vmem:[#allocation7 + $0x70] sm:$0xf]
    %v272 = vld [vmem:[#allocation7 + $0x74] sm:$0xf]
    %v273 = vld [vmem:[#allocation7 + $0x78] sm:$0xf]
    %v274 = vld [vmem:[#allocation7 + $0x7c] sm:$0xf]
    %v275 = vld [vmem:[%s4] sm:$0x1]
    %v277 = vlaneseq
    %v278 = vshrl.u32 %v277, 7
    %v279 = vsub.s32 0, %v278
    %v280 = vrot.slane %v275, %v279
    %v314 = vunpack.c.l.b16 %v243
    %v315 = vunpack.c.l.b16 %v244
    %v316 = vunpack.c.l.b16 %v245
    %v317 = vunpack.c.l.b16 %v246
    %v318 = vunpack.c.l.b16 %v247
    %v319 = vunpack.c.l.b16 %v248
    %v320 = vunpack.c.l.b16 %v249
    %v321 = vunpack.c.l.b16 %v250
    %v322 = vunpack.c.l.b16 %v251
    %v323 = vunpack.c.l.b16 %v252
    %v324 = vunpack.c.l.b16 %v253
    %v325 = vunpack.c.l.b16 %v254
    %v326 = vunpack.c.l.b16 %v255
    %v327 = vunpack.c.l.b16 %v256
    %v328 = vunpack.c.l.b16 %v257
    %v329 = vunpack.c.l.b16 %v258
    %v330 = vunpack.c.l.b16 %v259
    %v331 = vunpack.c.l.b16 %v260
    %v332 = vunpack.c.l.b16 %v261
    %v333 = vunpack.c.l.b16 %v262
    %v334 = vunpack.c.l.b16 %v263
    %v335 = vunpack.c.l.b16 %v264
    %v336 = vunpack.c.l.b16 %v265
    %v337 = vunpack.c.l.b16 %v266
    %v338 = vunpack.c.l.b16 %v267
    %v339 = vunpack.c.l.b16 %v268
    %v340 = vunpack.c.l.b16 %v269
    %v341 = vunpack.c.l.b16 %v270
    %v342 = vunpack.c.l.b16 %v271
    %v343 = vunpack.c.l.b16 %v272
    %v344 = vunpack.c.l.b16 %v273
    %v345 = vunpack.c.l.b16 %v274
    %v346 = vpack.c.b16 %v315, %v314
    %v347 = vpack.c.b16 %v317, %v316
    %v348 = vpack.c.b16 %v319, %v318
    %v349 = vpack.c.b16 %v321, %v320
    %v350 = vpack.c.b16 %v323, %v322
    %v351 = vpack.c.b16 %v325, %v324
    %v352 = vpack.c.b16 %v327, %v326
    %v353 = vpack.c.b16 %v329, %v328
    %v354 = vpack.c.b16 %v331, %v330
    %v355 = vpack.c.b16 %v333, %v332
    %v356 = vpack.c.b16 %v335, %v334
    %v357 = vpack.c.b16 %v337, %v336
    %v358 = vpack.c.b16 %v339, %v338
    %v359 = vpack.c.b16 %v341, %v340
    %v360 = vpack.c.b16 %v343, %v342
    %v361 = vpack.c.b16 %v345, %v344
    %378 = vmatprep.subr.bf16.mxu0 0
    %379 = vmatpush1.bf16.msra.mxu0 %v353
    %380 = vmatprep.subr.bf16.mxu0 0
    %381 = vmatpush1.bf16.msra.mxu0 %v352
    %382 = vmatprep.subr.bf16.mxu0 0
    %383 = vmatpush1.bf16.msra.mxu0 %v351
    %384 = vmatprep.subr.bf16.mxu0 0
    %385 = vmatpush1.bf16.msra.mxu0 %v350
    %386 = vmatprep.subr.bf16.mxu0 0
    %387 = vmatpush1.bf16.msra.mxu0 %v349
    %388 = vmatprep.subr.bf16.mxu0 0
    %389 = vmatpush1.bf16.msra.mxu0 %v348
    %390 = vmatprep.subr.bf16.mxu0 0
    %391 = vmatpush1.bf16.msra.mxu0 %v347
    %392 = vmatprep.subr.bf16.mxu0 0
    %393 = vmatpush1.bf16.msra.mxu0 %v346
    %394 = vmatprep.subr.bf16.mxu0 0
    %395 = vmatpush2.bf16.msra.mxu0 %v361
    %396 = vmatprep.subr.bf16.mxu0 0
    %397 = vmatpush2.bf16.msra.mxu0 %v360
    %398 = vmatprep.subr.bf16.mxu0 0
    %399 = vmatpush2.bf16.msra.mxu0 %v359
    %400 = vmatprep.subr.bf16.mxu0 0
    %401 = vmatpush2.bf16.msra.mxu0 %v358
    %402 = vmatprep.subr.bf16.mxu0 0
    %403 = vmatpush2.bf16.msra.mxu0 %v357
    %404 = vmatprep.subr.bf16.mxu0 0
    %405 = vmatpush2.bf16.msra.mxu0 %v356
    %406 = vmatprep.subr.bf16.mxu0 0
    %407 = vmatpush2.bf16.msra.mxu0 %v355
    %408 = vmatprep.subr.bf16.mxu0 0
    %409 = vmatpush2.bf16.msra.mxu0 %v354
    %410 = vmatprep.mubr.bf16.mxu0 %v242
    %411 = vmatmul.mubr.bf16.gmra.mxu0 %v241
    %v412 = vpop.f32.mrf.mxu0
    %v413 = vadd.f32 %v280, %v412
    %v414 = vpop.f32.mrf.mxu0
    %v415 = vpop.f32.mrf.mxu0
    %v416 = vadd.f32 %v280, %v415
    %v417 = vpop.f32.mrf.mxu0
    %418 = vdwg.mxu0
    %v419 = vmax.f32 %v413, 0.0
    %v420 = vmax.f32 %v416, 0.0
    %v421 = vpack.c.bf16 %v420, %v419
    %v422 = vld [vmem:[#allocation8] sm:$0xf]
    %v423 = vld [vmem:[#allocation8 + $0x4] sm:$0xf]
    %v424 = vld [vmem:[#allocation8 + $0x8] sm:$0xf]
    %v425 = vld [vmem:[#allocation8 + $0xc] sm:$0xf]
    %v426 = vld [vmem:[#allocation8 + $0x10] sm:$0xf]
    %v427 = vld [vmem:[#allocation8 + $0x14] sm:$0xf]
    %v428 = vld [vmem:[#allocation8 + $0x18] sm:$0xf]
    %v429 = vld [vmem:[#allocation8 + $0x1c] sm:$0xf]
    %v430 = vld [vmem:[#allocation8 + $0x20] sm:$0xf]
    %v431 = vld [vmem:[#allocation8 + $0x24] sm:$0xf]
    %v432 = vld [vmem:[#allocation8 + $0x28] sm:$0xf]
    %v433 = vld [vmem:[#allocation8 + $0x2c] sm:$0xf]
    %v434 = vld [vmem:[#allocation8 + $0x30] sm:$0xf]
    %v435 = vld [vmem:[#allocation8 + $0x34] sm:$0xf]
    %v436 = vld [vmem:[#allocation8 + $0x38] sm:$0xf]
    %v437 = vld [vmem:[#allocation8 + $0x3c] sm:$0xf]
    %v438 = vld [vmem:[%s6] sm:$0x1]
    %v440 = vlaneseq
    %v441 = vshrl.u32 %v440, 7
    %v442 = vsub.s32 0, %v441
    %v443 = vrot.slane %v438, %v442
    %v461 = vunpack.c.l.b16 %v422
    %v462 = vunpack.c.l.b16 %v423
    %v463 = vunpack.c.l.b16 %v424
    %v464 = vunpack.c.l.b16 %v425
    %v465 = vunpack.c.l.b16 %v426
    %v466 = vunpack.c.l.b16 %v427
    %v467 = vunpack.c.l.b16 %v428
    %v468 = vunpack.c.l.b16 %v429
    %v469 = vunpack.c.l.b16 %v430
    %v470 = vunpack.c.l.b16 %v431
    %v471 = vunpack.c.l.b16 %v432
    %v472 = vunpack.c.l.b16 %v433
    %v473 = vunpack.c.l.b16 %v434
    %v474 = vunpack.c.l.b16 %v435
    %v475 = vunpack.c.l.b16 %v436
    %v476 = vunpack.c.l.b16 %v437
    %v477 = vpack.c.b16 %v462, %v461
    %v478 = vpack.c.b16 %v464, %v463
    %v479 = vpack.c.b16 %v466, %v465
    %v480 = vpack.c.b16 %v468, %v467
    %v481 = vpack.c.b16 %v470, %v469
    %v482 = vpack.c.b16 %v472, %v471
    %v483 = vpack.c.b16 %v474, %v473
    %v484 = vpack.c.b16 %v476, %v475
    %493 = vmatprep.subr.bf16.mxu0 0
    %494 = vmatpush1.bf16.msra.mxu0 %v484
    %495 = vmatprep.subr.bf16.mxu0 0
    %496 = vmatpush1.bf16.msra.mxu0 %v483
    %497 = vmatprep.subr.bf16.mxu0 0
    %498 = vmatpush1.bf16.msra.mxu0 %v482
    %499 = vmatprep.subr.bf16.mxu0 0
    %500 = vmatpush1.bf16.msra.mxu0 %v481
    %501 = vmatprep.subr.bf16.mxu0 0
    %502 = vmatpush1.bf16.msra.mxu0 %v480
    %503 = vmatprep.subr.bf16.mxu0 0
    %504 = vmatpush1.bf16.msra.mxu0 %v479
    %505 = vmatprep.subr.bf16.mxu0 0
    %506 = vmatpush1.bf16.msra.mxu0 %v478
    %507 = vmatprep.subr.bf16.mxu0 0
    %508 = vmatpush1.bf16.msra.mxu0 %v477
    %509 = vmatprep.subr.bf16.mxu0 0
    %510 = vmatpush2.bf16.msra.mxu0 0
    %511 = vmatprep.subr.bf16.mxu0 0
    %512 = vmatpush2.bf16.msra.mxu0 0
    %513 = vmatprep.subr.bf16.mxu0 0
    %514 = vmatpush2.bf16.msra.mxu0 0
    %515 = vmatprep.subr.bf16.mxu0 0
    %516 = vmatpush2.bf16.msra.mxu0 0
    %517 = vmatprep.subr.bf16.mxu0 0
    %518 = vmatpush2.bf16.msra.mxu0 0
    %519 = vmatprep.subr.bf16.mxu0 0
    %520 = vmatpush2.bf16.msra.mxu0 0
    %521 = vmatprep.subr.bf16.mxu0 0
    %522 = vmatpush2.bf16.msra.mxu0 0
    %523 = vmatprep.subr.bf16.mxu0 0
    %524 = vmatpush2.bf16.msra.mxu0 0
    %525 = vmatprep.mubr.bf16.mxu0 0
    %526 = vmatmul.mubr.bf16.gmra.mxu0 %v421
    %v527 = vpop.f32.mrf.mxu0
    %v528 = vadd.f32 %v443, %v527
    %v529 = vpop.f32.mrf.mxu0
    %v530 = vpop.f32.mrf.mxu0
    %v531 = vadd.f32 %v443, %v530
    %v532 = vpop.f32.mrf.mxu0
    %533 = vdwg.mxu0
    %v534 = vmax.f32 %v528, 0.0
    %v535 = vmax.f32 %v531, 0.0
    %v536 = vpack.c.bf16 %v535, %v534
    %v537 = vld [vmem:[#allocation10] sm:$0xf]
    %v538 = vld [vmem:[#allocation10 + $0x4] sm:$0xf]
    %v539 = vld [vmem:[#allocation10 + $0x8] sm:$0xf]
    %v540 = vld [vmem:[#allocation10 + $0xc] sm:$0xf]
    %v541 = vld [vmem:[#allocation10 + $0x10] sm:$0xf]
    %v542 = vld [vmem:[#allocation10 + $0x14] sm:$0xf]
    %v543 = vld [vmem:[#allocation10 + $0x18] sm:$0xf]
    %v544 = vld [vmem:[#allocation10 + $0x1c] sm:$0xf]
    %v545 = vld [vmem:[#allocation10 + $0x20] sm:$0xf]
    %v546 = vld [vmem:[#allocation10 + $0x24] sm:$0xf]
    %v547 = vld [vmem:[#allocation10 + $0x28] sm:$0xf]
    %v548 = vld [vmem:[#allocation10 + $0x2c] sm:$0xf]
    %v549 = vld [vmem:[#allocation10 + $0x30] sm:$0xf]
    %v550 = vld [vmem:[#allocation10 + $0x34] sm:$0xf]
    %v551 = vld [vmem:[#allocation10 + $0x38] sm:$0xf]
    %v552 = vld [vmem:[#allocation10 + $0x3c] sm:$0xf]
    %v553 = vld [vmem:[%s8] sm:$0x1]
    %v555 = vlaneseq
    %v556 = vshrl.u32 %v555, 7
    %v557 = vsub.s32 0, %v556
    %v558 = vrot.slane %v553, %v557
    %v576 = vunpack.c.l.b16 %v537
    %v577 = vunpack.c.l.b16 %v538
    %v578 = vunpack.c.l.b16 %v539
    %v579 = vunpack.c.l.b16 %v540
    %v580 = vunpack.c.l.b16 %v541
    %v581 = vunpack.c.l.b16 %v542
    %v582 = vunpack.c.l.b16 %v543
    %v583 = vunpack.c.l.b16 %v544
    %v584 = vunpack.c.l.b16 %v545
    %v585 = vunpack.c.l.b16 %v546
    %v586 = vunpack.c.l.b16 %v547
    %v587 = vunpack.c.l.b16 %v548
    %v588 = vunpack.c.l.b16 %v549
    %v589 = vunpack.c.l.b16 %v550
    %v590 = vunpack.c.l.b16 %v551
    %v591 = vunpack.c.l.b16 %v552
    %v592 = vpack.c.b16 %v577, %v576
    %v593 = vpack.c.b16 %v579, %v578
    %v594 = vpack.c.b16 %v581, %v580
    %v595 = vpack.c.b16 %v583, %v582
    %v596 = vpack.c.b16 %v585, %v584
    %v597 = vpack.c.b16 %v587, %v586
    %v598 = vpack.c.b16 %v589, %v588
    %v599 = vpack.c.b16 %v591, %v590
    %608 = vmatprep.subr.bf16.mxu0 0
    %609 = vmatpush1.bf16.msra.mxu0 %v599
    %610 = vmatprep.subr.bf16.mxu0 0
    %611 = vmatpush1.bf16.msra.mxu0 %v598
    %612 = vmatprep.subr.bf16.mxu0 0
    %613 = vmatpush1.bf16.msra.mxu0 %v597
    %614 = vmatprep.subr.bf16.mxu0 0
    %615 = vmatpush1.bf16.msra.mxu0 %v596
    %616 = vmatprep.subr.bf16.mxu0 0
    %617 = vmatpush1.bf16.msra.mxu0 %v595
    %618 = vmatprep.subr.bf16.mxu0 0
    %619 = vmatpush1.bf16.msra.mxu0 %v594
    %620 = vmatprep.subr.bf16.mxu0 0
    %621 = vmatpush1.bf16.msra.mxu0 %v593
    %622 = vmatprep.subr.bf16.mxu0 0
    %623 = vmatpush1.bf16.msra.mxu0 %v592
    %624 = vmatprep.subr.bf16.mxu0 0
    %625 = vmatpush2.bf16.msra.mxu0 0
    %626 = vmatprep.subr.bf16.mxu0 0
    %627 = vmatpush2.bf16.msra.mxu0 0
    %628 = vmatprep.subr.bf16.mxu0 0
    %629 = vmatpush2.bf16.msra.mxu0 0
    %630 = vmatprep.subr.bf16.mxu0 0
    %631 = vmatpush2.bf16.msra.mxu0 0
    %632 = vmatprep.subr.bf16.mxu0 0
    %633 = vmatpush2.bf16.msra.mxu0 0
    %634 = vmatprep.subr.bf16.mxu0 0
    %635 = vmatpush2.bf16.msra.mxu0 0
    %636 = vmatprep.subr.bf16.mxu0 0
    %637 = vmatpush2.bf16.msra.mxu0 0
    %638 = vmatprep.subr.bf16.mxu0 0
    %639 = vmatpush2.bf16.msra.mxu0 0
    %640 = vmatprep.mubr.bf16.mxu0 0
    %641 = vmatmul.mubr.bf16.gmra.mxu0 %v536
    %v642 = vpop.f32.mrf.mxu0
    %v643 = vadd.f32 %v558, %v642
    %v644 = vpop.f32.mrf.mxu0
    %v645 = vpop.f32.mrf.mxu0
    %v646 = vadd.f32 %v558, %v645
    %v647 = vpop.f32.mrf.mxu0
    %648 = vdwg.mxu0
    %v649 = vpack.c.bf16 %v646, %v643
    %v651 = vunpack.c.l.b16 %v649
    %v652 = vunpack.c.h.b16 %v649
    %v653 = vpack.c.b16 %v651, %v651
    %v654 = vpack.c.b16 %v652, %v652
    %657 = vst [vmem:[#allocation11] sm:$0xf] %v653
    %658 = vst [vmem:[#allocation11 + $0x4] sm:$0xf] %v654
    // Predicated region
    $region58: #{tpu_custom_call.1} parent=1 // pred_check
      _
    $region59: #{tpu_custom_call.1} parent=1 // pred_check_branch
      %660 = sbr.rel (0) target = $region61
    $region60: #{tpu_custom_call.1} parent=1 // pred_region
      %s662 = ssub.s32 128, 64
      %663 = vsyncadd [#allocation4], %s662
      %s664 = sshll.u32 [#allocation11], 4
      %s665 = int_to_ptr.vmem [resolvable:$true] %s664
      %670 = dma.vmem_to_hbm [thread:$0]  %s665, 64, %s9, [#allocation4], 64, 64, 4
    $region61: #{tpu_custom_call.1} parent=1 // pred_fallthru
      _
    // Predicated region
    $region62: #{tpu_custom_call.1} parent=1 // pred_check
      _
    $region63: #{tpu_custom_call.1} parent=1 // pred_check_branch
      %672 = sbr.rel (0) target = $region65
    $region64: #{tpu_custom_call.1} parent=1 // pred_region
      %673 = dma.done [#allocation4], 128
    $region65: #{tpu_custom_call.1} parent=1 // pred_fallthru
      _
    %674 = vsyncpa [#allocation3], 1
    %675 = vsyncpa [#allocation6], 1
    %676 = vsyncpa [#allocation9], 1
    %677 = vsyncpa [#allocation4], 1

</llo_original>
